<compile_context>
chip_gen: v7x
topology: tpu7x:2x2x1
jax: 0.10.0
libtpu: 0.0.40
codegen_flags: <defaults>
</compile_context>

<pallas_src>
import functools

import jax
import jax.numpy as jnp
from jax.experimental import pallas as pl
from jax.experimental.pallas import tpu as pltpu

BN_EPS = 1e-5
HALO = 128  # lane-aligned halo tile supplying the K-1 overlap columns (requires K-1 <= 128)


def _active_ben(z):
    """ActiveBen: z<=-1 -> z+1/3 ; -1<z<1 -> z*(z^2+3)/6 ; z>=1 -> z-1/3."""
    mid = z * (z * z + 3.0) * (1.0 / 6.0)
    return jnp.where(z <= -1.0, z + 1.0 / 3.0, jnp.where(z >= 1.0, z - 1.0 / 3.0, mid))


def _conv_tile(x_cur_ref, x_hal_ref, w_ref, stk_ref, K, C_in, TL):
    """Conv1d on one length tile as ONE MXU contraction.

    Builds the stacked (K*C_in, TL) operand once in a VMEM scratch (K static shifted slices of
    the combined (C_in, TL+HALO) window), then a single (C_out, K*C_in) @ (K*C_in, TL) matmul
    with f32 accumulation.
    """
    xw = jnp.concatenate([x_cur_ref[...], x_hal_ref[...]], axis=-1)  # (C_in, TL+HALO), 128-aligned
    for k in range(K):  # K is small and static -> unrolled
        stk_ref[k * C_in:(k + 1) * C_in, :] = xw[:, k:k + TL]
    return jnp.dot(w_ref[...], stk_ref[...], preferred_element_type=jnp.float32)  # (C_out, TL)


def _accumulate_stats(stats_ref, y, j, L_out, TL):
    """Add masked per-channel sum / sum-of-squares of this tile into the per-n accumulator."""
    col = j * TL + jax.lax.broadcasted_iota(jnp.int32, y.shape, 1)
    ym = jnp.where(col < L_out, y, 0.0)  # padded output columns must not bias the stats
    stats_ref[...] += jnp.concatenate(
        [jnp.sum(ym, axis=1, keepdims=True), jnp.sum(ym * ym, axis=1, keepdims=True)], axis=1)


def conv_stats_y_kernel(x_cur_ref, x_hal_ref, w_ref, y_ref, stats_ref, stk_ref,
                        *, K, C_in, L_out, TL):
    """Pass 1 (cached-y variant): conv -> lane-dense bf16 y cache + per-n sum/sumsq partials."""
    j = pl.program_id(1)

    @pl.when(j == 0)
    def _init():
        stats_ref[...] = jnp.zeros_like(stats_ref)

    y = _conv_tile(x_cur_ref, x_hal_ref, w_ref, stk_ref, K, C_in, TL)  # (C_out, TL) f32
    y_ref[...] = y.astype(y_ref.dtype)
    _accumulate_stats(stats_ref, y, j, L_out, TL)


def conv_stats_kernel(x_cur_ref, x_hal_ref, w_ref, stats_ref, stk_ref,
                      *, K, C_in, L_out, TL):
    """Pass 1 (recompute variant): conv -> per-n sum/sumsq partials only."""
    j = pl.program_id(1)

    @pl.when(j == 0)
    def _init():
        stats_ref[...] = jnp.zeros_like(stats_ref)

    y = _conv_tile(x_cur_ref, x_hal_ref, w_ref, stk_ref, K, C_in, TL)
    _accumulate_stats(stats_ref, y, j, L_out, TL)


def bn_act_kernel(y_ref, scale_ref, shift_ref, o_ref):
    """Pass 2 (cached-y variant): pure elementwise scale/shift + ActiveBen (no matmul, no x)."""
    z = y_ref[...].astype(jnp.float32) * scale_ref[...] + shift_ref[...]
    o_ref[...] = _active_ben(z).astype(o_ref.dtype)


def conv_bn_act_kernel(x_cur_ref, x_hal_ref, w_ref, scale_ref, shift_ref, o_ref, stk_ref,
                       *, K, C_in, TL):
    """Pass 2 (recompute variant): redo the cheap conv, folded BN scale/shift + ActiveBen."""
    y = _conv_tile(x_cur_ref, x_hal_ref, w_ref, stk_ref, K, C_in, TL)
    z = y * scale_ref[...] + shift_ref[...]
    o_ref[...] = _active_ben(z).astype(o_ref.dtype)


def _tpu_vmem_capacity_bytes():
    try:
        cap = getattr(pltpu.get_tpu_info(), "vmem_capacity_bytes", None)
        if cap:
            return int(cap)
    except Exception:
        pass
    return 64 * 1024 * 1024  # conservative (v7x-sized) default


def conv_block_1d(x, conv_w, conv_b, bn_gamma, bn_beta, *, cache_conv="auto", max_tile=None):
    """x: (N, C_in, L) f32.  conv_w: (C_out, C_in, K).  Returns (N, C_out, L_out) f32."""
    N, C_in, L = x.shape
    C_out, _, K = conv_w.shape
    L_out = L - K + 1  # stride=1, padding=0, dilation=1
    assert L_out >= 1 and K - 1 <= HALO

    if cache_conv == "auto":
        # Caching y costs a bf16 write+read of (N, C_out, ~L); recomputing the conv in pass 2
        # re-streams x (+halo) and redoes the FLOPs.  Cache when C_out is not much larger than
        # C_in (caching also frees the MXU entirely in pass 2).
        cache_conv = C_out <= 2 * C_in

    # Generation-aware tiling: v5e/v6e have 128 MiB VMEM, v7x only 64 MiB per TensorCore.
    vmem_cap = _tpu_vmem_capacity_bytes()
    if vmem_cap >= (100 << 20):
        vmem_limit, tile_cap = 100 << 20, 2048     # v5e / v6e
    else:
        vmem_limit, tile_cap = 48 << 20, 1024      # v7x
    if max_tile is not None:
        tile_cap = max_tile

    # bf16 streaming halves the dominant HBM traffic and hits the native bf16 MXU path; fall
    # back to f32 when C_in is odd so the stacked per-tap sublane offsets stay aligned with
    # bf16 row packing.
    stream_dtype = jnp.bfloat16 if C_in % 2 == 0 else jnp.float32
    sbytes = jnp.dtype(stream_dtype).itemsize

    # Rough per-length-column VMEM bytes (double-buffered x/out tiles, stacked scratch, temps).
    per_col = 2 * sbytes * C_in + 2 * 4 * C_out + sbytes * K * C_in + sbytes * C_in + 4 * C_out
    budget_tl = max(128, (vmem_limit // (2 * per_col)) // 128 * 128)
    TL = int(max(128, min(tile_cap, budget_tl, pl.cdiv(L_out, 128) * 128)))
    num_j = pl.cdiv(L_out, TL)
    L_pad = num_j * TL + HALO

    x_pad = jnp.pad(x, ((0, 0), (0, 0), (0, L_pad - L))).astype(stream_dtype)
    # TODO(synk): the full-tensor pad (and the trailing length slice below) are extra HBM copies;
    # a pl.Element overlapping window + store-masked partial last block would remove both.

    # Flattened per-tap weights: w2d[o, k*C_in + c] = conv_w[o, c, k]  -> (C_out, K*C_in).
    w2d = jnp.transpose(conv_w, (0, 2, 1)).reshape(C_out, K * C_in).astype(stream_dtype)
    # conv bias is dropped: a per-channel bias added before train-mode BatchNorm cancels exactly
    # in the mean subtraction, so the normalized output is identical without it.
    del conv_b

    x_cur_spec = pl.BlockSpec((None, C_in, TL), lambda n, j: (n, 0, j))
    x_hal_spec = pl.BlockSpec((None, C_in, HALO), lambda n, j: (n, 0, (j + 1) * (TL // HALO)))
    w_spec = pl.BlockSpec((C_out, K * C_in), lambda n, j: (0, 0))
    vec_spec = pl.BlockSpec((C_out, 1), lambda n, j: (0, 0))
    stats_spec = pl.BlockSpec((None, C_out, 2), lambda n, j: (n, 0, 0))
    tile_spec = pl.BlockSpec((None, C_out, TL), lambda n, j: (n, 0, j))
    stk_scratch = pltpu.VMEM((K * C_in, TL), stream_dtype)
    # TODO(synk): for very large C_out (>=256) add a third grid axis tiling C_out ("parallel")
    # so weight/output tiles shrink instead of TL (matters under v7x's 64 MiB VMEM).

    grid = (N, num_j)
    conv_flops = 2 * N * num_j * TL * K * C_in * C_out
    x_bytes = N * num_j * (TL + HALO) * C_in * sbytes
    y_bytes = N * num_j * TL * C_out * 2
    out_bytes = N * num_j * TL * C_out * 4
    stats_bytes = N * C_out * 2 * 4
    w_bytes = C_out * K * C_in * sbytes

    # ---- Pass 1: conv + per-n channel sum / sum-of-squares (N axis "parallel" for megacore) ---
    if cache_conv:
        y_cache, stats = pl.pallas_call(
            functools.partial(conv_stats_y_kernel, K=K, C_in=C_in, L_out=L_out, TL=TL),
            out_shape=(jax.ShapeDtypeStruct((N, C_out, num_j * TL), jnp.bfloat16),
                       jax.ShapeDtypeStruct((N, C_out, 2), jnp.float32)),
            grid=grid,
            in_specs=[x_cur_spec, x_hal_spec, w_spec],
            out_specs=(tile_spec, stats_spec),
            scratch_shapes=[stk_scratch],
            compiler_params=pltpu.CompilerParams(
                dimension_semantics=("parallel", "arbitrary"),
                vmem_limit_bytes=vmem_limit),
            cost_estimate=pl.CostEstimate(
                flops=conv_flops, transcendentals=0,
                bytes_accessed=x_bytes + y_bytes + stats_bytes + w_bytes),
        )(x_pad, x_pad, w2d)
    else:
        stats = pl.pallas_call(
            functools.partial(conv_stats_kernel, K=K, C_in=C_in, L_out=L_out, TL=TL),
            out_shape=jax.ShapeDtypeStruct((N, C_out, 2), jnp.float32),
            grid=grid,
            in_specs=[x_cur_spec, x_hal_spec, w_spec],
            out_specs=stats_spec,
            scratch_shapes=[stk_scratch],
            compiler_params=pltpu.CompilerParams(
                dimension_semantics=("parallel", "arbitrary"),
                vmem_limit_bytes=vmem_limit),
            cost_estimate=pl.CostEstimate(
                flops=conv_flops, transcendentals=0,
                bytes_accessed=x_bytes + stats_bytes + w_bytes),
        )(x_pad, x_pad, w2d)

    # Fold BatchNorm1d (train-mode batch statistics, biased variance) into scale/shift.
    s = jnp.sum(stats, axis=0)                       # combine per-n partials -> (C_out, 2)
    M = N * L_out
    mean = s[:, 0] / M
    var = jnp.maximum(s[:, 1] / M - mean * mean, 0.0)
    # TODO(synk): E[y^2]-E[y]^2 in f32 can cancel for very large N*L; a Welford/compensated
    # combination of the per-n partials would be more robust at extreme scales.
    inv_std = jax.lax.rsqrt(var + BN_EPS)
    scale = (bn_gamma.astype(jnp.float32) * inv_std).reshape(C_out, 1)
    shift = (bn_beta.astype(jnp.float32) - mean * scale[:, 0]).reshape(C_out, 1)
    # TODO(synk): BatchNorm1d running_mean/running_var buffer updates (a training-time side
    # effect of the PyTorch module) are not reproduced; forward output only.

    # ---- Pass 2: normalize + ActiveBen (pure elementwise when y was cached) ----
    if cache_conv:
        out_pad = pl.pallas_call(
            bn_act_kernel,
            out_shape=jax.ShapeDtypeStruct((N, C_out, num_j * TL), jnp.float32),
            grid=grid,
            in_specs=[tile_spec, vec_spec, vec_spec],
            out_specs=tile_spec,
            compiler_params=pltpu.CompilerParams(
                dimension_semantics=("parallel", "parallel"),
                vmem_limit_bytes=vmem_limit),
            cost_estimate=pl.CostEstimate(
                flops=6 * N * num_j * TL * C_out, transcendentals=0,
                bytes_accessed=y_bytes + out_bytes + 2 * C_out * 4),
        )(y_cache, scale, shift)
    else:
        out_pad = pl.pallas_call(
            functools.partial(conv_bn_act_kernel, K=K, C_in=C_in, TL=TL),
            out_shape=jax.ShapeDtypeStruct((N, C_out, num_j * TL), jnp.float32),
            grid=grid,
            in_specs=[x_cur_spec, x_hal_spec, w_spec, vec_spec, vec_spec],
            out_specs=tile_spec,
            scratch_shapes=[stk_scratch],
            compiler_params=pltpu.CompilerParams(
                dimension_semantics=("parallel", "parallel"),
                vmem_limit_bytes=vmem_limit),
            cost_estimate=pl.CostEstimate(
                flops=conv_flops + 6 * N * num_j * TL * C_out, transcendentals=0,
                bytes_accessed=x_bytes + out_bytes + w_bytes + 2 * C_out * 4),
        )(x_pad, x_pad, w2d, scale, shift)

    if num_j * TL == L_out:
        return out_pad
    return out_pad[:, :, :L_out]


def _reference(x, conv_w, conv_b, bn_gamma, bn_beta):
    """Pure-JAX ConvBlock_1D reference: Conv1d(+bias) -> train-mode BatchNorm1d -> ActiveBen."""
    _, _, K = conv_w.shape
    L_out = x.shape[-1] - K + 1
    y = conv_b[None, :, None] + sum(
        jnp.einsum("oc,ncl->nol", conv_w[:, :, k], x[:, :, k:k + L_out],
                   precision=jax.lax.Precision.HIGHEST) for k in range(K))
    mu = jnp.mean(y, axis=(0, 2), keepdims=True)
    var = jnp.mean((y - mu) ** 2, axis=(0, 2), keepdims=True)
    z = (y - mu) * jax.lax.rsqrt(var + BN_EPS) * bn_gamma[None, :, None] + bn_beta[None, :, None]
    return jnp.where(z <= -1.0, z + 1.0 / 3.0,
                     jnp.where(z >= 1.0, z - 1.0 / 3.0, z * (z * z + 3.0) / 6.0))


if __name__ == "__main__":
    key = jax.random.PRNGKey(0)
    N, C_in, C_out, L, K = 2, 4, 8, 16, 3
    L_out = L - K + 1

    k1, k2, k3, k4, k5 = jax.random.split(key, 5)
    x = jax.random.normal(k1, (N, C_in, L), dtype=jnp.float32)
    conv_w = 0.1 * jax.random.normal(k2, (C_out, C_in, K), dtype=jnp.float32)
    conv_b = 0.05 * jax.random.normal(k3, (C_out,), dtype=jnp.float32)
    bn_gamma = 1.0 + 0.1 * jax.random.normal(k4, (C_out,), dtype=jnp.float32)
    bn_beta = 0.1 * jax.random.normal(k5, (C_out,), dtype=jnp.float32)

    out_cached = conv_block_1d(x, conv_w, conv_b, bn_gamma, bn_beta)  # auto -> cached-y path here
    out_recomp = conv_block_1d(x, conv_w, conv_b, bn_gamma, bn_beta, cache_conv=False)
    jax.block_until_ready((out_cached, out_recomp))
    assert out_cached.shape == (N, C_out, L_out)
    assert out_recomp.shape == (N, C_out, L_out)

    # Tight check: same math on the bf16-rounded operands the kernel actually streams.
    x_b = x.astype(jnp.bfloat16).astype(jnp.float32)
    w_b = conv_w.astype(jnp.bfloat16).astype(jnp.float32)
    ref_b = _reference(x_b, w_b, conv_b, bn_gamma, bn_beta)
    err_recomp = float(jnp.max(jnp.abs(out_recomp - ref_b)))
    err_cached = float(jnp.max(jnp.abs(out_cached - ref_b)))   # includes bf16 y-cache rounding
    # Loose sanity check: exact f32 PyTorch-module semantics (kernel trades a little precision
    # for bf16 streaming).
    ref_f32 = _reference(x, conv_w, conv_b, bn_gamma, bn_beta)
    err_module = float(jnp.max(jnp.abs(out_cached - ref_f32)))

    assert err_recomp < 2e-3, f"recompute-path mismatch vs bf16-consistent reference: {err_recomp}"
    assert err_cached < 3e-2, f"cached-path mismatch vs bf16-consistent reference: {err_cached}"
    assert err_module < 1e-1, f"mismatch vs f32 module reference: {err_module}"
    print("KERNEL_OK")
</pallas_src>

<mosaic_0001>
module attributes {stable_mosaic.version = 11 : i64} {
  func.func @conv_stats_y_kernel(%arg0: i32, %arg1: i32, %arg2: memref<1x4x128xbf16, #tpu.memory_space<vmem>>, %arg3: memref<1x4x128xbf16, #tpu.memory_space<vmem>>, %arg4: memref<8x12xbf16, #tpu.memory_space<vmem>>, %arg5: memref<1x8x128xbf16, #tpu.memory_space<vmem>>, %arg6: memref<1x8x2xf32, #tpu.memory_space<vmem>>, %arg7: memref<12x128xbf16, #tpu.memory_space<vmem>>) attributes {dimension_semantics = [#tpu.dimension_semantics<parallel>, #tpu.dimension_semantics<arbitrary>], iteration_bounds = array<i64: 2, 1>, scalar_prefetch = 0 : i64, scratch_operands = 1 : i64, tpu.core_type = #tpu.core_type<tc>, window_params = [{transform_indices = @transform_0, window_bounds = array<i64: 1, 4, 128>}, {transform_indices = @transform_1, window_bounds = array<i64: 1, 4, 128>}, {pipeline_mode = #tpu.pipeline_mode<synchronous>, transform_indices = @transform_2, window_bounds = array<i64: 8, 12>}, {transform_indices = @transform_3, window_bounds = array<i64: 1, 8, 128>}, {transform_indices = @transform_4, window_bounds = array<i64: 1, 8, 2>}]} {
    %c0_i32 = arith.constant 0 : i32
    %0 = arith.cmpi eq, %arg1, %c0_i32 : i32
    %1 = arith.extui %0 : i1 to i32
    %c0_i32_0 = arith.constant 0 : i32
    %2 = arith.cmpi ne, %1, %c0_i32_0 : i32
    scf.if %2 {
      %cst_26 = arith.constant 0.000000e+00 : f32
      %41 = vector.broadcast %cst_26 : f32 to vector<8x2xf32>
      %c0_27 = arith.constant 0 : index
      %c0_28 = arith.constant 0 : index
      %c0_29 = arith.constant 0 : index
      %42 = vector.load %arg6[%c0_27, %c0_28, %c0_29] : memref<1x8x2xf32, #tpu.memory_space<vmem>>, vector<1x8x2xf32>
      %43 = vector.shape_cast %42 : vector<1x8x2xf32> to vector<8x2xf32>
      %44 = vector.shape_cast %41 : vector<8x2xf32> to vector<1x8x2xf32>
      tpu.vector_store %arg6[%c0_27, %c0_28, %c0_29], %44 {strides = array<i32>} : memref<1x8x2xf32, #tpu.memory_space<vmem>>, vector<1x8x2xf32>,
    } else {
    }
    %c0 = arith.constant 0 : index
    %c0_1 = arith.constant 0 : index
    %c0_2 = arith.constant 0 : index
    %3 = vector.load %arg2[%c0, %c0_1, %c0_2] : memref<1x4x128xbf16, #tpu.memory_space<vmem>>, vector<1x4x128xbf16>
    %4 = vector.shape_cast %3 : vector<1x4x128xbf16> to vector<4x128xbf16>
    %c0_3 = arith.constant 0 : index
    %c0_4 = arith.constant 0 : index
    %c0_5 = arith.constant 0 : index
    %5 = vector.load %arg3[%c0_3, %c0_4, %c0_5] : memref<1x4x128xbf16, #tpu.memory_space<vmem>>, vector<1x4x128xbf16>
    %6 = vector.shape_cast %5 : vector<1x4x128xbf16> to vector<4x128xbf16>
    %7 = tpu.concatenate %4, %6 in 1 : vector<4x128xbf16>, vector<4x128xbf16> -> vector<4x256xbf16>
    %8 = vector.extract_strided_slice %7 {offsets = [0, 0], sizes = [4, 128], strides = [1, 1]} : vector<4x256xbf16> to vector<4x128xbf16>
    %c0_6 = arith.constant 0 : index
    %c0_7 = arith.constant 0 : index
    %9 = vector.load %arg7[%c0_6, %c0_7] : memref<12x128xbf16, #tpu.memory_space<vmem>>, vector<4x128xbf16>
    tpu.vector_store %arg7[%c0_6, %c0_7], %8 {strides = array<i32>} : memref<12x128xbf16, #tpu.memory_space<vmem>>, vector<4x128xbf16>,
    %10 = vector.extract_strided_slice %7 {offsets = [0, 1], sizes = [4, 128], strides = [1, 1]} : vector<4x256xbf16> to vector<4x128xbf16>
    %c4 = arith.constant 4 : index
    %c0_8 = arith.constant 0 : index
    %11 = vector.load %arg7[%c4, %c0_8] : memref<12x128xbf16, #tpu.memory_space<vmem>>, vector<4x128xbf16>
    tpu.vector_store %arg7[%c4, %c0_8], %10 {strides = array<i32>} : memref<12x128xbf16, #tpu.memory_space<vmem>>, vector<4x128xbf16>,
    %12 = vector.extract_strided_slice %7 {offsets = [0, 2], sizes = [4, 128], strides = [1, 1]} : vector<4x256xbf16> to vector<4x128xbf16>
    %c8 = arith.constant 8 : index
    %c0_9 = arith.constant 0 : index
    %13 = vector.load %arg7[%c8, %c0_9] : memref<12x128xbf16, #tpu.memory_space<vmem>>, vector<4x128xbf16>
    tpu.vector_store %arg7[%c8, %c0_9], %12 {strides = array<i32>} : memref<12x128xbf16, #tpu.memory_space<vmem>>, vector<4x128xbf16>,
    %c0_10 = arith.constant 0 : index
    %c0_11 = arith.constant 0 : index
    %14 = vector.load %arg4[%c0_10, %c0_11] : memref<8x12xbf16, #tpu.memory_space<vmem>>, vector<8x12xbf16>
    %c0_12 = arith.constant 0 : index
    %c0_13 = arith.constant 0 : index
    %15 = vector.load %arg7[%c0_12, %c0_13] : memref<12x128xbf16, #tpu.memory_space<vmem>>, vector<12x128xbf16>
    %cst = arith.constant dense<0.000000e+00> : vector<8x128xf32>
    %16 = tpu.matmul %14, %15, %cst {dimension_numbers = #tpu.dot_dimension_numbers<[1], [0], [0], [1], [0, 0, 1, 1], [], []>} : vector<8x12xbf16>, vector<12x128xbf16>, vector<8x128xf32> -> vector<8x128xf32>
    %17 = arith.truncf %16 : vector<8x128xf32> to vector<8x128xbf16>
    %c0_14 = arith.constant 0 : index
    %c0_15 = arith.constant 0 : index
    %c0_16 = arith.constant 0 : index
    %18 = vector.load %arg5[%c0_14, %c0_15, %c0_16] : memref<1x8x128xbf16, #tpu.memory_space<vmem>>, vector<1x8x128xbf16>
    %19 = vector.shape_cast %18 : vector<1x8x128xbf16> to vector<8x128xbf16>
    %20 = vector.shape_cast %17 : vector<8x128xbf16> to vector<1x8x128xbf16>
    tpu.vector_store %arg5[%c0_14, %c0_15, %c0_16], %20 {strides = array<i32>} : memref<1x8x128xbf16, #tpu.memory_space<vmem>>, vector<1x8x128xbf16>,
    %c128_i32 = arith.constant 128 : i32
    %21 = arith.muli %arg1, %c128_i32 : i32
    %22 = tpu.iota {dimensions = array<i32: 1>} : vector<8x128xi32>
    %23 = vector.broadcast %21 : i32 to vector<8x128xi32>
    %24 = arith.addi %23, %22 : vector<8x128xi32>
    %c14_i32 = arith.constant 14 : i32
    %25 = vector.broadcast %c14_i32 : i32 to vector<8x128xi32>
    %26 = arith.cmpi slt, %24, %25 : vector<8x128xi32>
    %cst_17 = arith.constant 0.000000e+00 : f32
    %27 = vector.broadcast %cst_17 : f32 to vector<8x128xf32>
    %28 = arith.select %26, %16, %27 : vector<8x128xi1>, vector<8x128xf32>
    %c0_18 = arith.constant 0 : index
    %c0_19 = arith.constant 0 : index
    %c0_20 = arith.constant 0 : index
    %29 = vector.load %arg6[%c0_18, %c0_19, %c0_20] : memref<1x8x2xf32, #tpu.memory_space<vmem>>, vector<1x8x2xf32>
    %30 = vector.shape_cast %29 : vector<1x8x2xf32> to vector<8x2xf32>
    %cst_21 = arith.constant dense<0.000000e+00> : vector<8xf32>
    %31 = vector.multi_reduction <add>, %28, %cst_21 [1] : vector<8x128xf32> to vector<8xf32>
    %32 = vector.shape_cast %31 : vector<8xf32> to vector<8x1xf32>
    %33 = arith.mulf %28, %28 : vector<8x128xf32>
    %cst_22 = arith.constant dense<0.000000e+00> : vector<8xf32>
    %34 = vector.multi_reduction <add>, %33, %cst_22 [1] : vector<8x128xf32> to vector<8xf32>
    %35 = vector.shape_cast %34 : vector<8xf32> to vector<8x1xf32>
    %36 = tpu.concatenate %32, %35 in 1 : vector<8x1xf32>, vector<8x1xf32> -> vector<8x2xf32>
    %37 = arith.addf %30, %36 : vector<8x2xf32>
    %c0_23 = arith.constant 0 : index
    %c0_24 = arith.constant 0 : index
    %c0_25 = arith.constant 0 : index
    %38 = vector.load %arg6[%c0_23, %c0_24, %c0_25] : memref<1x8x2xf32, #tpu.memory_space<vmem>>, vector<1x8x2xf32>
    %39 = vector.shape_cast %38 : vector<1x8x2xf32> to vector<8x2xf32>
    %40 = vector.shape_cast %37 : vector<8x2xf32> to vector<1x8x2xf32>
    tpu.vector_store %arg6[%c0_23, %c0_24, %c0_25], %40 {strides = array<i32>} : memref<1x8x2xf32, #tpu.memory_space<vmem>>, vector<1x8x2xf32>,
    return
  }
  func.func @transform_0(%arg0: i32, %arg1: i32) -> (i32, i32, i32) {
    %c0_i32 = arith.constant 0 : i32
    %c0_i32_0 = arith.constant 0 : i32
    return %arg0, %c0_i32, %arg1 : i32, i32, i32
  }
  func.func @transform_1(%arg0: i32, %arg1: i32) -> (i32, i32, i32) {
    %c1_i32 = arith.constant 1 : i32
    %0 = arith.addi %arg1, %c1_i32 : i32
    %c1_i32_0 = arith.constant 1 : i32
    %1 = arith.muli %0, %c1_i32_0 : i32
    %c0_i32 = arith.constant 0 : i32
    %c0_i32_1 = arith.constant 0 : i32
    return %arg0, %c0_i32, %1 : i32, i32, i32
  }
  func.func @transform_2(%arg0: i32, %arg1: i32) -> (i32, i32) {
    %c0_i32 = arith.constant 0 : i32
    %c0_i32_0 = arith.constant 0 : i32
    %c0_i32_1 = arith.constant 0 : i32
    return %c0_i32, %c0_i32_0 : i32, i32
  }
  func.func @transform_3(%arg0: i32, %arg1: i32) -> (i32, i32, i32) {
    %c0_i32 = arith.constant 0 : i32
    %c0_i32_0 = arith.constant 0 : i32
    return %arg0, %c0_i32, %arg1 : i32, i32, i32
  }
  func.func @transform_4(%arg0: i32, %arg1: i32) -> (i32, i32, i32) {
    %c0_i32 = arith.constant 0 : i32
    %c0_i32_0 = arith.constant 0 : i32
    %c0_i32_1 = arith.constant 0 : i32
    return %arg0, %c0_i32, %c0_i32_0 : i32, i32, i32
  }
}

</mosaic_0001>

<llo_original>
// kernel: tpu_custom_call.1
$region0: #{tpu_custom_call.1}
  #allocation0 [shape = 'u32[]', space=smem, size = 0x4, offset = 0x4, fixed_abs, tag = 'smem constant byte address 0x4 - core index']
  #allocation1 [shape = 'u32[144,128]{1,0:T(1,128)}', space=vmem, size = 0x12000, scoped, tag = 'internal scratch']
  #allocation2 [shape = 'bf16[12,128]{1,0:T(8,128)(2,1)}', space=vmem, size = 0x1000, scoped, tag = 'scratch operand']
  %s0 = inlined_call_operand.hbm [shape: bf16[2,4,256], index: 0, kind: input, shape index: {}]
  %s1 = inlined_call_operand.hbm [shape: bf16[2,4,256], index: 1, kind: input, shape index: {}]
  %s2 = inlined_call_operand.vmem [shape: bf16[8,12], index: 2, kind: input, shape index: {}]
  %s3 = inlined_call_operand.hbm [shape: bf16[2,8,128], index: 3, kind: output, shape index: {0}]
  %s4 = inlined_call_operand.vmem [shape: f32[2,8,2], index: 4, kind: output, shape index: {1}]
  %5 = xla_tuple %s3, %s4
  %s6 = sld [smem:[#allocation0]]
  $region65: #{tpu_custom_call.1} parent=0
    _
  %s8 = ssub.s32 1, %s6
  %s9 = scalar_select 0, %s8, %s6
  $region1: #{tpu_custom_call.1} parent=0
    #allocation3 [shape = 'u8[2048]{0}', space=vmem, size = 0x800, scoped, tag = 'input window, operand 0']
    #allocation4 [shape = 's32[2]{0}', space=sflag, size = 0x8, scoped, tag = 'scoped memory for tpu_custom_call.1']
    #allocation5 [shape = 's32[2]{0}', space=sflag, size = 0x8, scoped, tag = 'scoped memory for tpu_custom_call.1']
    #allocation6 [shape = 'u8[2048]{0}', space=vmem, size = 0x800, scoped, tag = 'input window, operand 1']
    #allocation7 [shape = 's32[2]{0}', space=sflag, size = 0x8, scoped, tag = 'scoped memory for tpu_custom_call.1']
    #allocation8 [shape = 'u8[4096]{0}', space=vmem, size = 0x1000, scoped, tag = 'output window, operand 0']
    %10 = vsyncpa [#allocation4], 0
    %s11 = scalar_lea.sflag [#allocation4], 1
    %12 = vsyncpa %s11, 0
    %13 = vsyncpa [#allocation7], 0
    %s14 = scalar_lea.sflag [#allocation7], 1
    %15 = vsyncpa %s14, 0
    %16 = vsyncpa [#allocation5], 0
    %s17 = scalar_lea.sflag [#allocation5], 1
    %18 = vsyncpa %s17, 0
    loop: start=0, step=1, limit=4
    $region2: #{tpu_custom_call.1} parent=1 // loop_pre_header
      _
    $region3: #{tpu_custom_call.1} parent=1 // loop_header
      %s20 = sphi 0, %s24
      %p21 = scmp.ge.s32.totalorder %s20, 4
      %s27 = sphi 0, %s39
      %s28 = sphi 0, %s35
      %s29 = sphi 0, %s27
      %s30 = sphi 0, %s28
      %s31 = sphi 0, %s29
      %s32 = sphi 0, %s30
      %s44 = sphi 0, %s46
      %s47 = sphi 0, %s44
      %s48 = sphi 0, %s47
      %s64 = sphi 0, %s48
      %s74 = sphi 0, %s76
      %s77 = sphi 0, %s74
      %s78 = sphi 0, %s77
      %s94 = sphi 0, %s78
      %s98 = sphi 0, %s98
      %s100 = sphi 0, %s98
      %s101 = sphi 0, %s100
      %s115 = sphi 0, %s101
      %s123 = sphi 0, %s125
      %s126 = sphi 0, %s123
      %s127 = sphi 0, %s126
      %s143 = sphi 0, %s127
      %s149 = sphi 0, %s151
      %s152 = sphi 0, %s149
      %s153 = sphi 0, %s152
      %s169 = sphi 0, %s153
    $region4: #{tpu_custom_call.1} parent=1 // loop_header_branch
      %23 = sbr.rel (%p21) target = $region8
    $region5: #{tpu_custom_call.1} parent=1 // loop_body
      %s25 = ssub.s32 %s20, 1
      %s26 = ssub.s32 %s20, 2
      %s33 = sadd.s32 1, %s28
      %p34 = scmp.ge.s32.totalorder %s33, 1
      %s35 = scalar_select %p34, 0, %s33
      %s36 = sadd.s32 1, %s27
      %s37 = scalar_select %p34, %s36, %s27
      %p38 = scmp.ge.s32.totalorder %s37, 2
      %s39 = scalar_select %p38, 0, %s37
      %s40 = ssub.s32 %s27, %s39
      %s41 = ssub.s32 %s28, %s35
      %s42 = sor.u32 %s40, %s41
      %p43 = scmp.eq.s32.totalorder %s42, 0
      %s45 = sadd.s32 %s44, 1
      %s46 = scalar_select %p43, %s44, %s45
      %p49 = pneg %p43
      %p50 = scmp.eq.s32.totalorder %s20, 1
      %p51 = por %p49, %p50
      %p52 = scmp.ne.s32.totalorder %s44, %s47
      %p53 = scmp.eq.s32.totalorder %s20, 0
      %p54 = por %p52, %p53
      %p55 = scmp.ne.s32.totalorder %s44, %s47
      %p56 = scmp.eq.s32.totalorder %s25, 1
      %p57 = por %p55, %p56
      %p58 = scmp.ne.s32.totalorder %s47, %s48
      %p59 = scmp.eq.s32.totalorder %s25, 0
      %p60 = por %p58, %p59
      %p61 = scmp.ne.s32.totalorder %s47, %s48
      %p62 = scmp.eq.s32.totalorder %s26, 1
      %p63 = por %p61, %p62
      %p65 = scmp.ne.s32.totalorder %s48, %s64
      %p66 = scmp.eq.s32.totalorder %s26, 0
      %p67 = por %p65, %p66
      %s68 = sadd.s32 %s28, 1
      %s69 = sadd.s32 %s35, 1
      %s70 = ssub.s32 %s27, %s39
      %s71 = ssub.s32 %s68, %s69
      %s72 = sor.u32 %s70, %s71
      %p73 = scmp.eq.s32.totalorder %s72, 0
      %s75 = sadd.s32 %s74, 1
      %s76 = scalar_select %p73, %s74, %s75
      %p79 = pneg %p73
      %p80 = scmp.eq.s32.totalorder %s20, 1
      %p81 = por %p79, %p80
      %p82 = scmp.ne.s32.totalorder %s74, %s77
      %p83 = scmp.eq.s32.totalorder %s20, 0
      %p84 = por %p82, %p83
      %p85 = scmp.ne.s32.totalorder %s74, %s77
      %p86 = scmp.eq.s32.totalorder %s25, 1
      %p87 = por %p85, %p86
      %p88 = scmp.ne.s32.totalorder %s77, %s78
      %p89 = scmp.eq.s32.totalorder %s25, 0
      %p90 = por %p88, %p89
      %p91 = scmp.ne.s32.totalorder %s77, %s78
      %p92 = scmp.eq.s32.totalorder %s26, 1
      %p93 = por %p91, %p92
      %p95 = scmp.ne.s32.totalorder %s78, %s94
      %p96 = scmp.eq.s32.totalorder %s26, 0
      %p97 = por %p95, %p96
      %s99 = sadd.s32 %s98, 1
      %p102 = scmp.eq.s32.totalorder %s20, 1
      %p103 = scmp.ne.s32.totalorder %s98, %s100
      %p104 = scmp.eq.s32.totalorder %s20, 0
      %p105 = por %p103, %p104
      %p106 = scmp.ne.s32.totalorder %s98, %s100
      %p107 = scmp.eq.s32.totalorder %s25, 1
      %p108 = por %p106, %p107
      %p109 = scmp.ne.s32.totalorder %s100, %s101
      %p110 = scmp.eq.s32.totalorder %s25, 0
      %p111 = por %p109, %p110
      %p112 = scmp.ne.s32.totalorder %s100, %s101
      %p113 = scmp.eq.s32.totalorder %s26, 1
      %p114 = por %p112, %p113
      %p116 = scmp.ne.s32.totalorder %s101, %s115
      %p117 = scmp.eq.s32.totalorder %s26, 0
      %p118 = por %p116, %p117
      %s119 = ssub.s32 %s27, %s39
      %s120 = ssub.s32 %s28, %s35
      %s121 = sor.u32 %s119, %s120
      %p122 = scmp.eq.s32.totalorder %s121, 0
      %s124 = sadd.s32 %s123, 1
      %s125 = scalar_select %p122, %s123, %s124
      %p128 = pneg %p122
      %p129 = scmp.eq.s32.totalorder %s20, 1
      %p130 = por %p128, %p129
      %p131 = scmp.ne.s32.totalorder %s123, %s126
      %p132 = scmp.eq.s32.totalorder %s20, 0
      %p133 = por %p131, %p132
      %p134 = scmp.ne.s32.totalorder %s123, %s126
      %p135 = scmp.eq.s32.totalorder %s25, 1
      %p136 = por %p134, %p135
      %p137 = scmp.ne.s32.totalorder %s126, %s127
      %p138 = scmp.eq.s32.totalorder %s25, 0
      %p139 = por %p137, %p138
      %p140 = scmp.ne.s32.totalorder %s126, %s127
      %p141 = scmp.eq.s32.totalorder %s26, 1
      %p142 = por %p140, %p141
      %p144 = scmp.ne.s32.totalorder %s127, %s143
      %p145 = scmp.eq.s32.totalorder %s26, 0
      %p146 = por %p144, %p145
      %s147 = ssub.s32 %s27, %s39
      %p148 = scmp.eq.s32.totalorder %s147, 0
      %s150 = sadd.s32 %s149, 1
      %s151 = scalar_select %p148, %s149, %s150
      %p154 = pneg %p148
      %p155 = scmp.eq.s32.totalorder %s20, 1
      %p156 = por %p154, %p155
      %p157 = scmp.ne.s32.totalorder %s149, %s152
      %p158 = scmp.eq.s32.totalorder %s20, 0
      %p159 = por %p157, %p158
      %p160 = scmp.ne.s32.totalorder %s149, %s152
      %p161 = scmp.eq.s32.totalorder %s25, 1
      %p162 = por %p160, %p161
      %p163 = scmp.ne.s32.totalorder %s152, %s153
      %p164 = scmp.eq.s32.totalorder %s25, 0
      %p165 = por %p163, %p164
      %p166 = scmp.ne.s32.totalorder %s152, %s153
      %p167 = scmp.eq.s32.totalorder %s26, 1
      %p168 = por %p166, %p167
      %p170 = scmp.ne.s32.totalorder %s153, %s169
      %p171 = scmp.eq.s32.totalorder %s26, 0
      %p172 = por %p170, %p171
      %p173 = scmp.le.s32.totalorder 1, %s20
      %p174 = scmp.lt.s32.totalorder %s20, 3
      %p175 = pnand %p173, %p174
      %p176 = pneg %p175
      // Predicated region
      $region9: #{tpu_custom_call.1} parent=5 // pred_check
        _
      $region10: #{tpu_custom_call.1} parent=5 // pred_check_branch
        %178 = sbr.rel (%p175) target = $region12
      $region11: #{tpu_custom_call.1} parent=5 // pred_region
        %s179 = ssub.s32 %s20, 1
        // Predicated region
        $region13: #{tpu_custom_call.1} parent=11 // pred_check
          %p180 = pneg %p111
        $region14: #{tpu_custom_call.1} parent=11 // pred_check_branch
          %182 = sbr.rel (%p180) target = $region16
        $region15: #{tpu_custom_call.1} parent=11 // pred_region
          _
        $region16: #{tpu_custom_call.1} parent=11 // pred_fallthru
          _
      $region12: #{tpu_custom_call.1} parent=5 // pred_fallthru
        _
      %p183 = scmp.lt.s32.totalorder %s20, 2
      // Predicated region
      $region17: #{tpu_custom_call.1} parent=5 // pred_check
        %p184 = pneg %p183
      $region18: #{tpu_custom_call.1} parent=5 // pred_check_branch
        %186 = sbr.rel (%p184) target = $region20
      $region19: #{tpu_custom_call.1} parent=5 // pred_region
        // Predicated region
        $region21: #{tpu_custom_call.1} parent=19 // pred_check
          %p187 = pneg %p54
        $region22: #{tpu_custom_call.1} parent=19 // pred_check_branch
          %189 = sbr.rel (%p187) target = $region24
        $region23: #{tpu_custom_call.1} parent=19 // pred_region
          %s190 = sand.u32 %s44, 1
          %s191 = scalar_lea.sflag [#allocation4], %s190
          %s192 = sand.u32 %s44, 1
          %s193 = smul.addr %s192, 2
          %s194 = scalar_lea.vmem [#allocation3], %s193
          %s196 = ssub.s32 32, 32
          %197 = vsyncadd %s191, %s196
          %s198 = smul.addr %s27, 2
          %s199 = sadd.s32 %s28, %s198
          %s200 = smul.addr %s199, 32
          %s201 = scalar_lea.hbm %s0, %s200
          %s203 = sshll.u32 %s194, 4
          %s204 = int_to_ptr.vmem [resolvable:$true] %s203
          %206 = dma.hbm_to_vmem [thread:$0]  %s201, 32, %s204, %s191
        $region24: #{tpu_custom_call.1} parent=19 // pred_fallthru
          _
        // Predicated region
        $region25: #{tpu_custom_call.1} parent=19 // pred_check
          %p207 = pneg %p84
        $region26: #{tpu_custom_call.1} parent=19 // pred_check_branch
          %209 = sbr.rel (%p207) target = $region28
        $region27: #{tpu_custom_call.1} parent=19 // pred_region
          %s210 = sand.u32 %s74, 1
          %s211 = scalar_lea.sflag [#allocation7], %s210
          %s212 = sand.u32 %s74, 1
          %s213 = smul.addr %s212, 2
          %s214 = scalar_lea.vmem [#allocation6], %s213
          %s215 = sadd.s32 %s28, 1
          %s217 = ssub.s32 32, 32
          %218 = vsyncadd %s211, %s217
          %s219 = smul.addr %s27, 2
          %s220 = sadd.s32 %s215, %s219
          %s221 = smul.addr %s220, 32
          %s222 = scalar_lea.hbm %s1, %s221
          %s224 = sshll.u32 %s214, 4
          %s225 = int_to_ptr.vmem [resolvable:$true] %s224
          %227 = dma.hbm_to_vmem [thread:$0]  %s222, 32, %s225, %s211
        $region28: #{tpu_custom_call.1} parent=19 // pred_fallthru
          _
      $region20: #{tpu_custom_call.1} parent=5 // pred_fallthru
        _
      %p228 = scmp.le.s32.totalorder 1, %s20
      %p229 = scmp.lt.s32.totalorder %s20, 3
      %p230 = pnand %p228, %p229
      %p231 = pneg %p230
      // Predicated region
      $region29: #{tpu_custom_call.1} parent=5 // pred_check
        _
      $region30: #{tpu_custom_call.1} parent=5 // pred_check_branch
        %233 = sbr.rel (%p230) target = $region32
      $region31: #{tpu_custom_call.1} parent=5 // pred_region
        %s234 = ssub.s32 %s20, 1
        %s235 = sand.u32 %s47, 1
        %s236 = scalar_lea.sflag [#allocation4], %s235
        %s237 = sand.u32 %s47, 1
        %s238 = smul.addr %s237, 2
        %s239 = scalar_lea.vmem [#allocation3], %s238
        // Predicated region
        $region33: #{tpu_custom_call.1} parent=31 // pred_check
          %p240 = pneg %p60
        $region34: #{tpu_custom_call.1} parent=31 // pred_check_branch
          %242 = sbr.rel (%p240) target = $region36
        $region35: #{tpu_custom_call.1} parent=31 // pred_region
          %243 = dma.done %s236, 32
        $region36: #{tpu_custom_call.1} parent=31 // pred_fallthru
          _
        %s244 = sand.u32 %s77, 1
        %s245 = scalar_lea.sflag [#allocation7], %s244
        %s246 = sand.u32 %s77, 1
        %s247 = smul.addr %s246, 2
        %s248 = scalar_lea.vmem [#allocation6], %s247
        // Predicated region
        $region37: #{tpu_custom_call.1} parent=31 // pred_check
          %p249 = pneg %p90
        $region38: #{tpu_custom_call.1} parent=31 // pred_check_branch
          %251 = sbr.rel (%p249) target = $region40
        $region39: #{tpu_custom_call.1} parent=31 // pred_region
          %252 = dma.done %s245, 32
        $region40: #{tpu_custom_call.1} parent=31 // pred_fallthru
          _
        %s253 = sand.u32 %s47, 1
        %s254 = scalar_lea.sflag [#allocation4], %s253
        %s255 = sand.u32 %s47, 1
        %s256 = smul.addr %s255, 2
        %s257 = scalar_lea.vmem [#allocation3], %s256
        %p258 = pneg %p60
        %p259 = pneg %p57
        %s260 = sand.u32 %s77, 1
        %s261 = scalar_lea.sflag [#allocation7], %s260
        %s262 = sand.u32 %s77, 1
        %s263 = smul.addr %s262, 2
        %s264 = scalar_lea.vmem [#allocation6], %s263
        %p265 = pneg %p90
        %p266 = pneg %p87
        %p267 = pneg %p111
        %p268 = pneg %p108
        %p269 = pneg %p139
        %p270 = pneg %p136
        %s271 = sand.u32 %s126, 1
        %s272 = scalar_lea.sflag [#allocation5], %s271
        %s273 = sand.u32 %s126, 1
        %s274 = smul.addr %s273, 4
        %s275 = scalar_lea.vmem [#allocation8], %s274
        %p276 = pneg %p165
        %p277 = pneg %p162
        %p278 = scmp.lt.s32.totalorder %s29, 1
        %s279 = scalar_select %p278, %s29, 1
        %s280 = smul.addr %s279, 8
        %s281 = scalar_lea.vmem %s4, %s280
        %s282 = sadd.s32 %s30, 1
        %p283 = scmp.lt.s32.totalorder %s29, 1
        %s284 = scalar_select %p283, %s29, 1
        %s285 = smul.addr %s284, 8
        %s286 = scalar_lea.vmem %s4, %s285
        %p288 = scmp.eq.s32.totalorder %s30, 0
        // Predicated region
        $region41: #{tpu_custom_call.1} parent=31 // pred_check
          %p289 = pneg %p288
        $region42: #{tpu_custom_call.1} parent=31 // pred_check_branch
          %291 = sbr.rel (%p289) target = $region44
        $region43: #{tpu_custom_call.1} parent=31 // pred_region
          %vm292 = vcmask 15360
          %293 = vst.msk [vmem:[%s286] sm:$0xff] %vm292, 0.0
        $region44: #{tpu_custom_call.1} parent=31 // pred_fallthru
          _
        %v294 = vld [vmem:[%s239] sm:$0x3]
        %v295 = vld [vmem:[%s248] sm:$0x3]
        %296 = vst [vmem:[#allocation2] sm:$0x3] %v294
        %v299 = vunpack.c.l.b16 %v294
        %v300 = vunpack.c.l.b16 %v295
        %v301 = vpack.c.b16 %v300, %v299
        %v302 = vrot.slane %v301, 6
        %303 = vrot.lane.b32.xlu0 %v302, 127
        %v304 = vpop.permute.xlu0 %303
        %v305 = vrot.slane %v304, 4
        %vm306 = vcmask 1039360
        %v307 = vsel %vm306, %v304, %v305
        %309 = vst [vmem:[#allocation2] sm:$0xc] %v307
        %310 = vrot.lane.b32.xlu0 %v301, 126
        %v311 = vpop.permute.xlu0 %310
        %v312 = vrot.slane %v311, 4
        %vm313 = vcmask 1031168
        %v314 = vsel %vm313, %v311, %v312
        %316 = vst [vmem:[#allocation2 + $0x4] sm:$0x3] %v314
        %v317 = vld [vmem:[%s2] sm:$0xf]
        %v318 = vld [vmem:[#allocation2] sm:$0xf]
        %v319 = vld [vmem:[#allocation2 + $0x4] sm:$0x3]
        %v322 = vunpack.c.l.b16 %v318
        %v323 = vunpack.c.l.b16 %v319
        %v324 = vpack.c.b16 %v323, %v322
        %vm325 = vcmask 97280
        %v327 = vsel %vm325, %v317, 0
        %vm329 = vcmask 1045504
        %v331 = vsel %vm329, %v324, 0
        %333 = vmatprep.subr.bf16.mxu0 0
        %334 = vmatpush1.bf16.msra.mxu0 %v331
        %335 = vmatprep.subr.bf16.mxu0 0
        %336 = vmatpush1.bf16.msra.mxu0 0
        %337 = vmatprep.subr.bf16.mxu0 0
        %338 = vmatpush1.bf16.msra.mxu0 0
        %339 = vmatprep.subr.bf16.mxu0 0
        %340 = vmatpush1.bf16.msra.mxu0 0
        %341 = vmatprep.subr.bf16.mxu0 0
        %342 = vmatpush1.bf16.msra.mxu0 0
        %343 = vmatprep.subr.bf16.mxu0 0
        %344 = vmatpush1.bf16.msra.mxu0 0
        %345 = vmatprep.subr.bf16.mxu0 0
        %346 = vmatpush1.bf16.msra.mxu0 0
        %347 = vmatprep.subr.bf16.mxu0 0
        %348 = vmatpush1.bf16.msra.mxu0 0
        %349 = vmatprep.subr.bf16.mxu0 0
        %350 = vmatpush1.bf16.msra.mxu0 0
        %351 = vmatprep.subr.bf16.mxu0 0
        %352 = vmatpush1.bf16.msra.mxu0 0
        %353 = vmatprep.subr.bf16.mxu0 0
        %354 = vmatpush1.bf16.msra.mxu0 0
        %355 = vmatprep.subr.bf16.mxu0 0
        %356 = vmatpush1.bf16.msra.mxu0 0
        %357 = vmatprep.subr.bf16.mxu0 0
        %358 = vmatpush1.bf16.msra.mxu0 0
        %359 = vmatprep.subr.bf16.mxu0 0
        %360 = vmatpush1.bf16.msra.mxu0 0
        %361 = vmatprep.subr.bf16.mxu0 0
        %362 = vmatpush1.bf16.msra.mxu0 0
        %363 = vmatprep.subr.bf16.mxu0 0
        %364 = vmatpush1.bf16.msra.mxu0 0
        %365 = vmatprep.mubr.bf16.mxu0 0
        %366 = vmatmul.mubr.bf16.gmra.mrb[0].mxu0 %v327
        %v367 = vpop.f32.mrb[0].mxu0
        %v368 = vadd.f32 0.0, %v367
        %v369 = vpop.f32.mrb[0].mxu0
        %v370 = vpop.f32.mrb[0].mxu0
        %v371 = vpop.f32.mrb[0].mxu0
        %372 = vdwg.mxu0
        %v373 = vpack.c.bf16 %v368, %v368
        %374 = vst [vmem:[%s275] sm:$0xf] %v373
        %s375 = smul.u32 %s30, 128
        %v376 = vlaneseq
        %v377 = vand.u32 %v376, 127
        %v378 = vstv %s375
        %v379 = vadd.s32 %v378, %v377
        %vm380 = vcmp.lt.s32.totalorder %v379, 14
        %v381 = vsel %vm380, %v368, 0.0
        %v382 = vld [vmem:[%s286] sm:$0xff]
        %383 = vadd.xlane.f32.xlu0 %v381
        %v384 = vpop.xlane.xlu0 %383
        %v385 = vmul.f32 %v381, %v381
        %386 = vadd.xlane.f32.xlu0 %v385
        %v387 = vpop.xlane.xlu0 %386
        %vm388 = vcmask 7168
        %v389 = vsel %vm388, %v384, %v387
        %v390 = vadd.f32 %v382, %v389
        %vm391 = vcmask 15360
        %392 = vst.msk [vmem:[%s286] sm:$0xff] %vm391, %v390
        %s393 = sand.u32 %s126, 1
        %s394 = scalar_lea.sflag [#allocation5], %s393
        %s395 = sand.u32 %s126, 1
        %s396 = smul.addr %s395, 4
        %s397 = scalar_lea.vmem [#allocation8], %s396
        %p398 = scmp.lt.s32.totalorder %s29, 1
        %s399 = scalar_select %p398, %s29, 1
        %s400 = smul.addr %s399, 8
        %s401 = scalar_lea.vmem %s4, %s400
        // Predicated region
        $region45: #{tpu_custom_call.1} parent=31 // pred_check
          %p402 = pneg %p136
        $region46: #{tpu_custom_call.1} parent=31 // pred_check_branch
          %404 = sbr.rel (%p402) target = $region48
        $region47: #{tpu_custom_call.1} parent=31 // pred_region
          %s406 = ssub.s32 64, 64
          %407 = vsyncadd %s394, %s406
          %s408 = sadd.s32 %s30, %s29
          %s409 = smul.addr %s408, 64
          %s410 = scalar_lea.hbm %s3, %s409
          %s412 = sshll.u32 %s397, 4
          %s413 = int_to_ptr.vmem [resolvable:$true] %s412
          %415 = dma.vmem_to_hbm [thread:$0]  %s413, 64, %s410, %s394
        $region48: #{tpu_custom_call.1} parent=31 // pred_fallthru
          _
        // Predicated region
        $region49: #{tpu_custom_call.1} parent=31 // pred_check
          %p416 = pneg %p162
        $region50: #{tpu_custom_call.1} parent=31 // pred_check_branch
          %418 = sbr.rel (%p416) target = $region52
        $region51: #{tpu_custom_call.1} parent=31 // pred_region
          _
        $region52: #{tpu_custom_call.1} parent=31 // pred_fallthru
          _
      $region32: #{tpu_custom_call.1} parent=5 // pred_fallthru
        _
      %p419 = scmp.le.s32.totalorder 2, %s20
      // Predicated region
      $region53: #{tpu_custom_call.1} parent=5 // pred_check
        %p420 = pneg %p419
      $region54: #{tpu_custom_call.1} parent=5 // pred_check_branch
        %422 = sbr.rel (%p420) target = $region56
      $region55: #{tpu_custom_call.1} parent=5 // pred_region
        %s423 = ssub.s32 %s20, 2
        // Predicated region
        $region57: #{tpu_custom_call.1} parent=55 // pred_check
          %p424 = pneg %p142
        $region58: #{tpu_custom_call.1} parent=55 // pred_check_branch
          %426 = sbr.rel (%p424) target = $region60
        $region59: #{tpu_custom_call.1} parent=55 // pred_region
          %s427 = sand.u32 %s127, 1
          %s428 = scalar_lea.sflag [#allocation5], %s427
          %s429 = sand.u32 %s127, 1
          %s430 = smul.addr %s429, 4
          %s431 = scalar_lea.vmem [#allocation8], %s430
          %432 = dma.done %s428, 64
        $region60: #{tpu_custom_call.1} parent=55 // pred_fallthru
          _
        // Predicated region
        $region61: #{tpu_custom_call.1} parent=55 // pred_check
          %p433 = pneg %p168
        $region62: #{tpu_custom_call.1} parent=55 // pred_check_branch
          %435 = sbr.rel (%p433) target = $region64
        $region63: #{tpu_custom_call.1} parent=55 // pred_region
          %p436 = scmp.lt.s32.totalorder %s31, 1
          %s437 = scalar_select %p436, %s31, 1
          %s438 = smul.addr %s437, 8
          %s439 = scalar_lea.vmem %s4, %s438
        $region64: #{tpu_custom_call.1} parent=55 // pred_fallthru
          _
      $region56: #{tpu_custom_call.1} parent=5 // pred_fallthru
        _
    $region6: #{tpu_custom_call.1} parent=1 // loop_footer
      %s24 = sadd.s32 1, %s20
    $region7: #{tpu_custom_call.1} parent=1 // loop_footer_branch
      %19 = sbr.rel target = $region3
    $region8: #{tpu_custom_call.1} parent=1 // loop_exit
      _
    %440 = vsyncpa [#allocation4], 1
    %s441 = scalar_lea.sflag [#allocation4], 1
    %442 = vsyncpa %s441, 1
    %443 = vsyncpa [#allocation7], 1
    %s444 = scalar_lea.sflag [#allocation7], 1
    %445 = vsyncpa %s444, 1
    %446 = vsyncpa [#allocation5], 1
    %s447 = scalar_lea.sflag [#allocation5], 1
    %448 = vsyncpa %s447, 1

</llo_original>
